<compile_context>
chip_gen: v7x
topology: tpu7x:2x2x1
jax: 0.10.0
libtpu: 0.0.40
codegen_flags: <defaults>
</compile_context>

<pallas_src>
import functools

import jax
import jax.numpy as jnp
from jax.experimental import pallas as pl
from jax.experimental.pallas import tpu as pltpu

MAX_ACTION = 1.0      # stands in for C.MAX_ACTION (external constant in the reference)
LN_EPS = 1e-5         # PyTorch nn.LayerNorm default eps
LANE = 128
SUBLANE = 8
PACKED_SUBLANE = 16   # bf16 packed sublane multiple


def _round_up(x, m):
    return ((x + m - 1) // m) * m


def _cdiv(a, b):
    return (a + b - 1) // b


def _device_kind():
    try:
        return jax.devices()[0].device_kind.lower()
    except Exception:
        return ""


def _elementwise_dtype():
    """bf16 elementwise LN/ReLU on v6e/v7x (bf16 VALU); f32 elsewhere (e.g. v5e)."""
    kind = _device_kind()
    if ("v6" in kind) or ("v7" in kind):
        return jnp.bfloat16
    return jnp.float32


def _num_tensorcores_hint():
    """v7x has 2 TensorCores per chip; everything else in scope has 1."""
    return 2 if "v7" in _device_kind() else 1


def _ln_relu(h, gamma, beta, n_true, elem_dtype):
    """Single-pass LayerNorm over the last axis followed by ReLU.

    `h` is lane-padded to a multiple of 128 but the padded lanes are exactly zero
    (zero weight columns + zero bias), so they contribute nothing to the sums.
    We divide by the TRUE feature count and rely on zero-padded gamma/beta to keep
    the padded lanes of the output exactly zero.

    NOTE: single-pass variance var = E[x^2] - mean^2 (f32).  Matches PyTorch's
    biased variance; can cancel when |mean| >> std, but is well within tolerance
    at bf16-matmul precision with eps=1e-5.
    """
    inv_n = 1.0 / float(n_true)
    s = jnp.sum(h, axis=-1, keepdims=True)
    sq = jnp.sum(h * h, axis=-1, keepdims=True)
    mean = s * inv_n
    var = sq * inv_n - mean * mean
    inv = jax.lax.rsqrt(var + LN_EPS)
    if elem_dtype == jnp.float32:
        y = (h - mean) * inv * gamma + beta
    else:
        # bf16 normalize/affine + ReLU (binding VALU slot); reductions/rsqrt stay f32.
        scale = inv.astype(elem_dtype) * gamma.astype(elem_dtype)
        y = (h.astype(elem_dtype) - mean.astype(elem_dtype)) * scale + beta.astype(elem_dtype)
    return jnp.maximum(y, 0.0)


def actor_kernel(x_ref,                       # [TB, Dp]   bf16
                 w1_ref, b1_ref,              # [Dp, H1p] bf16, [1, H1p] f32
                 g1_ref, be1_ref,             # [1, H1p]  f32 (zero-padded lanes)
                 w2_ref, b2_ref,              # [H1p, H2p] bf16, [1, H2p] f32
                 g2_ref, be2_ref,             # [1, H2p]  f32
                 w3_ref, b3_ref,              # [H2p, Ap] bf16, [1, Ap] f32
                 o_ref,                       # [TB, Ap]  bf16 (lane-dense store)
                 *, hd1, hd2, max_action, elem_dtype):
    x = x_ref[...]                            # already bf16

    # fc1 -> LayerNorm -> ReLU
    h1 = jnp.dot(x, w1_ref[...], preferred_element_type=jnp.float32) + b1_ref[...]
    h1 = _ln_relu(h1, g1_ref[...], be1_ref[...], hd1, elem_dtype)
    h1 = h1.astype(jnp.bfloat16)              # no-op on the bf16 elementwise path

    # fc2 -> LayerNorm -> ReLU
    h2 = jnp.dot(h1, w2_ref[...], preferred_element_type=jnp.float32) + b2_ref[...]
    h2 = _ln_relu(h2, g2_ref[...], be2_ref[...], hd2, elem_dtype)
    h2 = h2.astype(jnp.bfloat16)

    # fc3 -> tanh -> MAX_ACTION scale
    a = jnp.dot(h2, w3_ref[...], preferred_element_type=jnp.float32) + b3_ref[...]
    a = jnp.tanh(a)
    if max_action != 1.0:                     # static constant: skip a dead vmul
        a = max_action * a
    o_ref[...] = a.astype(o_ref.dtype)


def _const2(i):
    # Constant block index for weights / biases: same (0, 0) block every grid
    # step -> Pallas keeps them VMEM-resident instead of re-DMAing per tile.
    return (0, 0)


@functools.partial(
    jax.jit, static_argnames=("hd1", "hd2", "action_dim", "max_action", "tb"))
def actor_forward(state, pparams, *, hd1, hd2, action_dim,
                  max_action=MAX_ACTION, tb=1024):
    """state: [B, input_dim] float32.  pparams: padded params from prepare_params."""
    B, D = state.shape
    Dp, H1p = pparams["w1"].shape
    H2p = pparams["w2"].shape[1]
    Ap = pparams["w3"].shape[1]

    elem_dtype = _elementwise_dtype()
    ncores = _num_tensorcores_hint()

    # Batch tiling: minimize padded rows and, on 2-TC parts, keep >= 2 tiles so the
    # "parallel" batch axis can be split across TensorCores.
    n_target = _cdiv(B, tb)
    if ncores >= 2 and B > SUBLANE:
        n_target = max(n_target, ncores)
        n_target = _round_up(n_target, 2)     # even tile count splits cleanly across 2 TCs
    TB = _round_up(_cdiv(B, n_target), SUBLANE)
    Bp = _round_up(B, TB)
    n_tiles = Bp // TB

    # Cast state to bf16 (halves activation DMA bytes); pad only if actually needed.
    xs = state.astype(jnp.bfloat16)
    if (Bp, Dp) != (B, D):
        xs = jnp.pad(xs, ((0, Bp - B), (0, Dp - D)))

    operands = (
        xs,
        pparams["w1"], pparams["b1"], pparams["g1"], pparams["be1"],
        pparams["w2"], pparams["b2"], pparams["g2"], pparams["be2"],
        pparams["w3"], pparams["b3"],
    )

    in_specs = [pl.BlockSpec((TB, Dp), lambda i: (i, 0))]                 # state: tiled over batch
    in_specs += [pl.BlockSpec(op.shape, _const2) for op in operands[1:]]  # params: VMEM-resident

    flops = 2 * Bp * (Dp * H1p + H1p * H2p + H2p * Ap)
    param_bytes = sum(int(o.size) * o.dtype.itemsize for o in operands[1:])
    bytes_accessed = param_bytes + int(xs.size) * 2 + Bp * Ap * 2

    # Only raise the scoped-VMEM cap if the footprint approaches v5e's 16 MiB default.
    vmem_est = (2 * param_bytes                       # default double-buffered params
                + 2 * TB * Dp * 2 + 2 * TB * Ap * 2   # double-buffered state/out tiles
                + 2 * TB * max(H1p, H2p) * 4)         # f32 intermediates headroom
    compiler_kwargs = dict(dimension_semantics=("parallel",))
    if vmem_est > (14 << 20):
        compiler_kwargs["vmem_limit_bytes"] = min(
            _round_up(vmem_est + (2 << 20), 1 << 20), 48 << 20)

    out = pl.pallas_call(
        functools.partial(actor_kernel, hd1=hd1, hd2=hd2,
                          max_action=max_action, elem_dtype=elem_dtype),
        out_shape=jax.ShapeDtypeStruct((Bp, Ap), jnp.bfloat16),           # bf16 store: half HBM write
        grid=(n_tiles,),
        in_specs=in_specs,
        out_specs=pl.BlockSpec((TB, Ap), lambda i: (i, 0)),               # lane-dense (Ap % 128 == 0)
        compiler_params=pltpu.CompilerParams(**compiler_kwargs),
        cost_estimate=pl.CostEstimate(
            flops=flops,
            transcendentals=Bp * (Ap + 2),
            bytes_accessed=bytes_accessed),
    )(*operands)

    # Slice padded batch rows / padded action lanes back to the true shape, f32 out.
    return out[:B, :action_dim].astype(jnp.float32)


def init_params(key, input_dim, hd1, hd2, action_dim):
    """Deterministic init mirroring ActorNetwork.initialize_weights_bias.
    Linear weights stored as [in_features, out_features] (pre-transposed)."""
    ks = jax.random.split(key, 6)
    f1 = 1.0 / float(hd1) ** 0.5       # fc1.weight.size()[0] == hd1_dims
    f2 = 1.0 / float(hd2) ** 0.5       # fc2.weight.size()[0] == hd2_dims
    f3 = 0.003

    def u(k, shape, lim):
        return jax.random.uniform(k, shape, jnp.float32, -lim, lim)

    return {
        "w1": u(ks[0], (input_dim, hd1), f1),
        "b1": u(ks[1], (hd1,), f1),
        "g1": jnp.ones((hd1,), jnp.float32),      # LayerNorm weight
        "be1": jnp.zeros((hd1,), jnp.float32),    # LayerNorm bias
        "w2": u(ks[2], (hd1, hd2), f2),
        "b2": u(ks[3], (hd2,), f2),
        "g2": jnp.ones((hd2,), jnp.float32),
        "be2": jnp.zeros((hd2,), jnp.float32),
        "w3": u(ks[4], (hd2, action_dim), f3),
        "b3": u(ks[5], (action_dim,), f3),
    }


def prepare_params(params):
    """Pad feature dims to lane multiples (128) and cast matmul weights to bf16.

    Padded weight columns/rows, biases, and LayerNorm gamma/beta are ZERO, so the
    padded lanes stay exactly zero through every layer and the results are
    identical to the unpadded network.  w1's row dim (the fc1 contraction dim) is
    padded to a multiple of 16 (bf16 packed sublane).
    This function is the single source of truth for the zero-padding invariant.
    """
    D, hd1 = params["w1"].shape
    hd2 = params["w2"].shape[1]
    act = params["w3"].shape[1]
    Dp = _round_up(D, PACKED_SUBLANE)
    H1p = _round_up(hd1, LANE)
    H2p = _round_up(hd2, LANE)
    Ap = _round_up(act, LANE)

    def padw(w, rp, cp):
        out = jnp.zeros((rp, cp), jnp.bfloat16)
        return out.at[: w.shape[0], : w.shape[1]].set(w.astype(jnp.bfloat16))

    def padv(v, cp):
        out = jnp.zeros((1, cp), jnp.float32)
        return out.at[0, : v.shape[0]].set(v.astype(jnp.float32))

    return {
        "w1": padw(params["w1"], Dp, H1p), "b1": padv(params["b1"], H1p),
        "g1": padv(params["g1"], H1p), "be1": padv(params["be1"], H1p),
        "w2": padw(params["w2"], H1p, H2p), "b2": padv(params["b2"], H2p),
        "g2": padv(params["g2"], H2p), "be2": padv(params["be2"], H2p),
        "w3": padw(params["w3"], H2p, Ap), "b3": padv(params["b3"], Ap),
    }


def reference_forward(state, params, max_action=MAX_ACTION, elem_dtype=jnp.float32):
    """Pure-JAX reference mirroring the kernel's precision (bf16 matmul operands,
    f32 accumulation, f32 LN statistics, elementwise normalize/ReLU in elem_dtype,
    bf16 output store)."""
    def ln_relu(x, g, b):
        n = x.shape[-1]
        inv_n = 1.0 / float(n)
        s = jnp.sum(x, axis=-1, keepdims=True)
        sq = jnp.sum(x * x, axis=-1, keepdims=True)
        mean = s * inv_n
        var = sq * inv_n - mean * mean
        inv = jax.lax.rsqrt(var + LN_EPS)
        if elem_dtype == jnp.float32:
            y = (x - mean) * inv * g + b
        else:
            scale = inv.astype(elem_dtype) * g.astype(elem_dtype)
            y = (x.astype(elem_dtype) - mean.astype(elem_dtype)) * scale + b.astype(elem_dtype)
        return jnp.maximum(y, 0.0)

    def lin(x, w, b):
        return jnp.dot(x.astype(jnp.bfloat16), w.astype(jnp.bfloat16),
                       preferred_element_type=jnp.float32) + b

    h1 = ln_relu(lin(state, params["w1"], params["b1"]), params["g1"], params["be1"])
    h2 = ln_relu(lin(h1, params["w2"], params["b2"]), params["g2"], params["be2"])
    a = max_action * jnp.tanh(lin(h2, params["w3"], params["b3"]))
    # Mirror the kernel's bf16 output store followed by the f32 cast in the wrapper.
    return a.astype(jnp.bfloat16).astype(jnp.float32)


if __name__ == "__main__":
    # Small shapes consistent with the module: batch=8, input_dims=(16,),
    # hd1_dims=64, hd2_dims=64, action_dim=4.
    B, D_IN, HD1, HD2, A = 8, 16, 64, 64, 4

    key = jax.random.PRNGKey(0)
    k_state, k_params = jax.random.split(key)

    state = jax.random.normal(k_state, (B, D_IN), jnp.float32)
    params = init_params(k_params, D_IN, HD1, HD2, A)
    pparams = prepare_params(params)

    # TODO(synk): the module's Adam optimizer / training step is not part of the
    # forward pass and is not translated here.
    out = actor_forward(state, pparams, hd1=HD1, hd2=HD2, action_dim=A)
    out = jax.block_until_ready(out)

    ref = reference_forward(state, params, elem_dtype=_elementwise_dtype())
    assert out.shape == (B, A)
    assert jnp.allclose(out, ref, atol=2e-3, rtol=1e-2), "mismatch vs reference"

    print("KERNEL_OK")
</pallas_src>

<mosaic_0001>
module attributes {stable_mosaic.version = 11 : i64} {
  func.func @actor_kernel(%arg0: i32, %arg1: memref<8x16xbf16, #tpu.memory_space<vmem>>, %arg2: memref<16x128xbf16, #tpu.memory_space<vmem>>, %arg3: memref<1x128xf32, #tpu.memory_space<vmem>>, %arg4: memref<1x128xf32, #tpu.memory_space<vmem>>, %arg5: memref<1x128xf32, #tpu.memory_space<vmem>>, %arg6: memref<128x128xbf16, #tpu.memory_space<vmem>>, %arg7: memref<1x128xf32, #tpu.memory_space<vmem>>, %arg8: memref<1x128xf32, #tpu.memory_space<vmem>>, %arg9: memref<1x128xf32, #tpu.memory_space<vmem>>, %arg10: memref<128x128xbf16, #tpu.memory_space<vmem>>, %arg11: memref<1x128xf32, #tpu.memory_space<vmem>>, %arg12: memref<8x128xbf16, #tpu.memory_space<vmem>>) attributes {dimension_semantics = [#tpu.dimension_semantics<parallel>], iteration_bounds = array<i64: 1>, scalar_prefetch = 0 : i64, scratch_operands = 0 : i64, tpu.core_type = #tpu.core_type<tc>, window_params = [{transform_indices = @transform_0, window_bounds = array<i64: 8, 16>}, {pipeline_mode = #tpu.pipeline_mode<synchronous>, transform_indices = @transform_1, window_bounds = array<i64: 16, 128>}, {pipeline_mode = #tpu.pipeline_mode<synchronous>, transform_indices = @transform_2, window_bounds = array<i64: 1, 128>}, {pipeline_mode = #tpu.pipeline_mode<synchronous>, transform_indices = @transform_3, window_bounds = array<i64: 1, 128>}, {pipeline_mode = #tpu.pipeline_mode<synchronous>, transform_indices = @transform_4, window_bounds = array<i64: 1, 128>}, {pipeline_mode = #tpu.pipeline_mode<synchronous>, transform_indices = @transform_5, window_bounds = array<i64: 128, 128>}, {pipeline_mode = #tpu.pipeline_mode<synchronous>, transform_indices = @transform_6, window_bounds = array<i64: 1, 128>}, {pipeline_mode = #tpu.pipeline_mode<synchronous>, transform_indices = @transform_7, window_bounds = array<i64: 1, 128>}, {pipeline_mode = #tpu.pipeline_mode<synchronous>, transform_indices = @transform_8, window_bounds = array<i64: 1, 128>}, {pipeline_mode = #tpu.pipeline_mode<synchronous>, transform_indices = @transform_9, window_bounds = array<i64: 128, 128>}, {pipeline_mode = #tpu.pipeline_mode<synchronous>, transform_indices = @transform_10, window_bounds = array<i64: 1, 128>}, {transform_indices = @transform_11, window_bounds = array<i64: 8, 128>}]} {
    %c0 = arith.constant 0 : index
    %c0_0 = arith.constant 0 : index
    %0 = vector.load %arg1[%c0, %c0_0] : memref<8x16xbf16, #tpu.memory_space<vmem>>, vector<8x16xbf16>
    %c0_1 = arith.constant 0 : index
    %c0_2 = arith.constant 0 : index
    %1 = vector.load %arg2[%c0_1, %c0_2] : memref<16x128xbf16, #tpu.memory_space<vmem>>, vector<16x128xbf16>
    %cst = arith.constant dense<0.000000e+00> : vector<8x128xf32>
    %2 = tpu.matmul %0, %1, %cst {dimension_numbers = #tpu.dot_dimension_numbers<[1], [0], [0], [1], [0, 0, 1, 1], [], []>} : vector<8x16xbf16>, vector<16x128xbf16>, vector<8x128xf32> -> vector<8x128xf32>
    %c0_3 = arith.constant 0 : index
    %c0_4 = arith.constant 0 : index
    %3 = vector.load %arg3[%c0_3, %c0_4] : memref<1x128xf32, #tpu.memory_space<vmem>>, vector<1x128xf32>
    %4 = vector.broadcast %3 : vector<1x128xf32> to vector<8x128xf32>
    %5 = arith.addf %2, %4 : vector<8x128xf32>
    %c0_5 = arith.constant 0 : index
    %c0_6 = arith.constant 0 : index
    %6 = vector.load %arg4[%c0_5, %c0_6] : memref<1x128xf32, #tpu.memory_space<vmem>>, vector<1x128xf32>
    %c0_7 = arith.constant 0 : index
    %c0_8 = arith.constant 0 : index
    %7 = vector.load %arg5[%c0_7, %c0_8] : memref<1x128xf32, #tpu.memory_space<vmem>>, vector<1x128xf32>
    %cst_9 = arith.constant dense<0.000000e+00> : vector<8xf32>
    %8 = vector.multi_reduction <add>, %5, %cst_9 [1] : vector<8x128xf32> to vector<8xf32>
    %9 = vector.shape_cast %8 : vector<8xf32> to vector<8x1xf32>
    %10 = arith.mulf %5, %5 : vector<8x128xf32>
    %cst_10 = arith.constant dense<0.000000e+00> : vector<8xf32>
    %11 = vector.multi_reduction <add>, %10, %cst_10 [1] : vector<8x128xf32> to vector<8xf32>
    %12 = vector.shape_cast %11 : vector<8xf32> to vector<8x1xf32>
    %cst_11 = arith.constant 1.562500e-02 : f32
    %13 = vector.broadcast %cst_11 : f32 to vector<8x1xf32>
    %14 = arith.mulf %9, %13 : vector<8x1xf32>
    %cst_12 = arith.constant 1.562500e-02 : f32
    %15 = vector.broadcast %cst_12 : f32 to vector<8x1xf32>
    %16 = arith.mulf %12, %15 : vector<8x1xf32>
    %17 = arith.mulf %14, %14 : vector<8x1xf32>
    %18 = arith.subf %16, %17 : vector<8x1xf32>
    %cst_13 = arith.constant 9.99999974E-6 : f32
    %19 = vector.broadcast %cst_13 : f32 to vector<8x1xf32>
    %20 = arith.addf %18, %19 : vector<8x1xf32>
    %21 = math.rsqrt %20 : vector<8x1xf32>
    %22 = vector.broadcast %14 : vector<8x1xf32> to vector<8x128xf32>
    %23 = arith.subf %5, %22 : vector<8x128xf32>
    %24 = vector.broadcast %21 : vector<8x1xf32> to vector<8x128xf32>
    %25 = arith.mulf %23, %24 : vector<8x128xf32>
    %26 = vector.broadcast %6 : vector<1x128xf32> to vector<8x128xf32>
    %27 = arith.mulf %25, %26 : vector<8x128xf32>
    %28 = vector.broadcast %7 : vector<1x128xf32> to vector<8x128xf32>
    %29 = arith.addf %27, %28 : vector<8x128xf32>
    %cst_14 = arith.constant 0.000000e+00 : f32
    %30 = vector.broadcast %cst_14 : f32 to vector<8x128xf32>
    %31 = arith.maximumf %29, %30 : vector<8x128xf32>
    %32 = arith.truncf %31 : vector<8x128xf32> to vector<8x128xbf16>
    %c0_15 = arith.constant 0 : index
    %c0_16 = arith.constant 0 : index
    %33 = vector.load %arg6[%c0_15, %c0_16] : memref<128x128xbf16, #tpu.memory_space<vmem>>, vector<128x128xbf16>
    %cst_17 = arith.constant dense<0.000000e+00> : vector<8x128xf32>
    %34 = tpu.matmul %32, %33, %cst_17 {dimension_numbers = #tpu.dot_dimension_numbers<[1], [0], [0], [1], [0, 0, 1, 1], [], []>} : vector<8x128xbf16>, vector<128x128xbf16>, vector<8x128xf32> -> vector<8x128xf32>
    %c0_18 = arith.constant 0 : index
    %c0_19 = arith.constant 0 : index
    %35 = vector.load %arg7[%c0_18, %c0_19] : memref<1x128xf32, #tpu.memory_space<vmem>>, vector<1x128xf32>
    %36 = vector.broadcast %35 : vector<1x128xf32> to vector<8x128xf32>
    %37 = arith.addf %34, %36 : vector<8x128xf32>
    %c0_20 = arith.constant 0 : index
    %c0_21 = arith.constant 0 : index
    %38 = vector.load %arg8[%c0_20, %c0_21] : memref<1x128xf32, #tpu.memory_space<vmem>>, vector<1x128xf32>
    %c0_22 = arith.constant 0 : index
    %c0_23 = arith.constant 0 : index
    %39 = vector.load %arg9[%c0_22, %c0_23] : memref<1x128xf32, #tpu.memory_space<vmem>>, vector<1x128xf32>
    %cst_24 = arith.constant dense<0.000000e+00> : vector<8xf32>
    %40 = vector.multi_reduction <add>, %37, %cst_24 [1] : vector<8x128xf32> to vector<8xf32>
    %41 = vector.shape_cast %40 : vector<8xf32> to vector<8x1xf32>
    %42 = arith.mulf %37, %37 : vector<8x128xf32>
    %cst_25 = arith.constant dense<0.000000e+00> : vector<8xf32>
    %43 = vector.multi_reduction <add>, %42, %cst_25 [1] : vector<8x128xf32> to vector<8xf32>
    %44 = vector.shape_cast %43 : vector<8xf32> to vector<8x1xf32>
    %cst_26 = arith.constant 1.562500e-02 : f32
    %45 = vector.broadcast %cst_26 : f32 to vector<8x1xf32>
    %46 = arith.mulf %41, %45 : vector<8x1xf32>
    %cst_27 = arith.constant 1.562500e-02 : f32
    %47 = vector.broadcast %cst_27 : f32 to vector<8x1xf32>
    %48 = arith.mulf %44, %47 : vector<8x1xf32>
    %49 = arith.mulf %46, %46 : vector<8x1xf32>
    %50 = arith.subf %48, %49 : vector<8x1xf32>
    %cst_28 = arith.constant 9.99999974E-6 : f32
    %51 = vector.broadcast %cst_28 : f32 to vector<8x1xf32>
    %52 = arith.addf %50, %51 : vector<8x1xf32>
    %53 = math.rsqrt %52 : vector<8x1xf32>
    %54 = vector.broadcast %46 : vector<8x1xf32> to vector<8x128xf32>
    %55 = arith.subf %37, %54 : vector<8x128xf32>
    %56 = vector.broadcast %53 : vector<8x1xf32> to vector<8x128xf32>
    %57 = arith.mulf %55, %56 : vector<8x128xf32>
    %58 = vector.broadcast %38 : vector<1x128xf32> to vector<8x128xf32>
    %59 = arith.mulf %57, %58 : vector<8x128xf32>
    %60 = vector.broadcast %39 : vector<1x128xf32> to vector<8x128xf32>
    %61 = arith.addf %59, %60 : vector<8x128xf32>
    %cst_29 = arith.constant 0.000000e+00 : f32
    %62 = vector.broadcast %cst_29 : f32 to vector<8x128xf32>
    %63 = arith.maximumf %61, %62 : vector<8x128xf32>
    %64 = arith.truncf %63 : vector<8x128xf32> to vector<8x128xbf16>
    %c0_30 = arith.constant 0 : index
    %c0_31 = arith.constant 0 : index
    %65 = vector.load %arg10[%c0_30, %c0_31] : memref<128x128xbf16, #tpu.memory_space<vmem>>, vector<128x128xbf16>
    %cst_32 = arith.constant dense<0.000000e+00> : vector<8x128xf32>
    %66 = tpu.matmul %64, %65, %cst_32 {dimension_numbers = #tpu.dot_dimension_numbers<[1], [0], [0], [1], [0, 0, 1, 1], [], []>} : vector<8x128xbf16>, vector<128x128xbf16>, vector<8x128xf32> -> vector<8x128xf32>
    %c0_33 = arith.constant 0 : index
    %c0_34 = arith.constant 0 : index
    %67 = vector.load %arg11[%c0_33, %c0_34] : memref<1x128xf32, #tpu.memory_space<vmem>>, vector<1x128xf32>
    %68 = vector.broadcast %67 : vector<1x128xf32> to vector<8x128xf32>
    %69 = arith.addf %66, %68 : vector<8x128xf32>
    %70 = math.tanh %69 : vector<8x128xf32>
    %71 = arith.truncf %70 : vector<8x128xf32> to vector<8x128xbf16>
    %c0_35 = arith.constant 0 : index
    %c0_36 = arith.constant 0 : index
    %72 = vector.load %arg12[%c0_35, %c0_36] : memref<8x128xbf16, #tpu.memory_space<vmem>>, vector<8x128xbf16>
    tpu.vector_store %arg12[%c0_35, %c0_36], %71 {strides = array<i32>} : memref<8x128xbf16, #tpu.memory_space<vmem>>, vector<8x128xbf16>,
    return
  }
  func.func @transform_0(%arg0: i32) -> (i32, i32) {
    %c0_i32 = arith.constant 0 : i32
    %c0_i32_0 = arith.constant 0 : i32
    return %arg0, %c0_i32 : i32, i32
  }
  func.func @transform_1(%arg0: i32) -> (i32, i32) {
    %c0_i32 = arith.constant 0 : i32
    %c0_i32_0 = arith.constant 0 : i32
    %c0_i32_1 = arith.constant 0 : i32
    return %c0_i32, %c0_i32_0 : i32, i32
  }
  func.func @transform_2(%arg0: i32) -> (i32, i32) {
    %c0_i32 = arith.constant 0 : i32
    %c0_i32_0 = arith.constant 0 : i32
    %c0_i32_1 = arith.constant 0 : i32
    return %c0_i32, %c0_i32_0 : i32, i32
  }
  func.func @transform_3(%arg0: i32) -> (i32, i32) {
    %c0_i32 = arith.constant 0 : i32
    %c0_i32_0 = arith.constant 0 : i32
    %c0_i32_1 = arith.constant 0 : i32
    return %c0_i32, %c0_i32_0 : i32, i32
  }
  func.func @transform_4(%arg0: i32) -> (i32, i32) {
    %c0_i32 = arith.constant 0 : i32
    %c0_i32_0 = arith.constant 0 : i32
    %c0_i32_1 = arith.constant 0 : i32
    return %c0_i32, %c0_i32_0 : i32, i32
  }
  func.func @transform_5(%arg0: i32) -> (i32, i32) {
    %c0_i32 = arith.constant 0 : i32
    %c0_i32_0 = arith.constant 0 : i32
    %c0_i32_1 = arith.constant 0 : i32
    return %c0_i32, %c0_i32_0 : i32, i32
  }
  func.func @transform_6(%arg0: i32) -> (i32, i32) {
    %c0_i32 = arith.constant 0 : i32
    %c0_i32_0 = arith.constant 0 : i32
    %c0_i32_1 = arith.constant 0 : i32
    return %c0_i32, %c0_i32_0 : i32, i32
  }
  func.func @transform_7(%arg0: i32) -> (i32, i32) {
    %c0_i32 = arith.constant 0 : i32
    %c0_i32_0 = arith.constant 0 : i32
    %c0_i32_1 = arith.constant 0 : i32
    return %c0_i32, %c0_i32_0 : i32, i32
  }
  func.func @transform_8(%arg0: i32) -> (i32, i32) {
    %c0_i32 = arith.constant 0 : i32
    %c0_i32_0 = arith.constant 0 : i32
    %c0_i32_1 = arith.constant 0 : i32
    return %c0_i32, %c0_i32_0 : i32, i32
  }
  func.func @transform_9(%arg0: i32) -> (i32, i32) {
    %c0_i32 = arith.constant 0 : i32
    %c0_i32_0 = arith.constant 0 : i32
    %c0_i32_1 = arith.constant 0 : i32
    return %c0_i32, %c0_i32_0 : i32, i32
  }
  func.func @transform_10(%arg0: i32) -> (i32, i32) {
    %c0_i32 = arith.constant 0 : i32
    %c0_i32_0 = arith.constant 0 : i32
    %c0_i32_1 = arith.constant 0 : i32
    return %c0_i32, %c0_i32_0 : i32, i32
  }
  func.func @transform_11(%arg0: i32) -> (i32, i32) {
    %c0_i32 = arith.constant 0 : i32
    %c0_i32_0 = arith.constant 0 : i32
    return %arg0, %c0_i32 : i32, i32
  }
}

</mosaic_0001>

<llo_original>
// kernel: actor_forward.1
$region0: #{actor_forward.1}
  #allocation0 [shape = 'u32[]', space=smem, size = 0x4, offset = 0x4, fixed_abs, tag = 'smem constant byte address 0x4 - core index']
  #allocation1 [shape = 'u32[144,128]{1,0:T(1,128)}', space=vmem, size = 0x12000, scoped, tag = 'internal scratch']
  %s0 = inlined_call_operand.vmem [shape: bf16[8,16], index: 0, kind: input, shape index: {}]
  %s1 = inlined_call_operand.vmem [shape: bf16[16,128], index: 1, kind: input, shape index: {}]
  %s2 = inlined_call_operand.vmem [shape: f32[1,128], index: 2, kind: input, shape index: {}]
  %s3 = inlined_call_operand.vmem [shape: f32[1,128], index: 3, kind: input, shape index: {}]
  %s4 = inlined_call_operand.vmem [shape: f32[1,128], index: 4, kind: input, shape index: {}]
  %s5 = inlined_call_operand.hbm [shape: bf16[128,128], index: 5, kind: input, shape index: {}]
  %s6 = inlined_call_operand.vmem [shape: f32[1,128], index: 6, kind: input, shape index: {}]
  %s7 = inlined_call_operand.vmem [shape: f32[1,128], index: 7, kind: input, shape index: {}]
  %s8 = inlined_call_operand.vmem [shape: f32[1,128], index: 8, kind: input, shape index: {}]
  %s9 = inlined_call_operand.hbm [shape: bf16[128,128], index: 9, kind: input, shape index: {}]
  %s10 = inlined_call_operand.vmem [shape: f32[1,128], index: 10, kind: input, shape index: {}]
  %s11 = inlined_call_operand.vmem [shape: bf16[8,128], index: 11, kind: output, shape index: {}]
  %s12 = sld [smem:[#allocation0]]
  $region62: #{actor_forward.1} parent=0
    _
  %s14 = ssub.s32 1, %s12
  %s15 = scalar_select 0, %s14, %s12
  $region1: #{actor_forward.1} parent=0
    #allocation2 [shape = 'u8[32768]{0}', space=vmem, size = 0x8000, scoped, tag = 'input window, operand 5, single buffered']
    #allocation3 [shape = 's32[1]{0}', space=sflag, size = 0x4, scoped, tag = 'scoped memory for actor_forward.1']
    #allocation4 [shape = 'u8[32768]{0}', space=vmem, size = 0x8000, scoped, tag = 'input window, operand 9, single buffered']
    #allocation5 [shape = 's32[1]{0}', space=sflag, size = 0x4, scoped, tag = 'scoped memory for actor_forward.1']
    %16 = vsyncpa [#allocation3], 0
    %17 = vsyncpa [#allocation5], 0
    // Predicated region
    $region2: #{actor_forward.1} parent=1 // pred_check
      _
    $region3: #{actor_forward.1} parent=1 // pred_check_branch
      %19 = sbr.rel (0) target = $region5
    $region4: #{actor_forward.1} parent=1 // pred_region
      _
    $region5: #{actor_forward.1} parent=1 // pred_fallthru
      _
    // Predicated region
    $region6: #{actor_forward.1} parent=1 // pred_check
      _
    $region7: #{actor_forward.1} parent=1 // pred_check_branch
      %21 = sbr.rel (0) target = $region9
    $region8: #{actor_forward.1} parent=1 // pred_region
      _
    $region9: #{actor_forward.1} parent=1 // pred_fallthru
      _
    // Predicated region
    $region10: #{actor_forward.1} parent=1 // pred_check
      _
    $region11: #{actor_forward.1} parent=1 // pred_check_branch
      %23 = sbr.rel (0) target = $region13
    $region12: #{actor_forward.1} parent=1 // pred_region
      _
    $region13: #{actor_forward.1} parent=1 // pred_fallthru
      _
    // Predicated region
    $region14: #{actor_forward.1} parent=1 // pred_check
      _
    $region15: #{actor_forward.1} parent=1 // pred_check_branch
      %25 = sbr.rel (0) target = $region17
    $region16: #{actor_forward.1} parent=1 // pred_region
      _
    $region17: #{actor_forward.1} parent=1 // pred_fallthru
      _
    // Predicated region
    $region18: #{actor_forward.1} parent=1 // pred_check
      _
    $region19: #{actor_forward.1} parent=1 // pred_check_branch
      %27 = sbr.rel (0) target = $region21
    $region20: #{actor_forward.1} parent=1 // pred_region
      _
    $region21: #{actor_forward.1} parent=1 // pred_fallthru
      _
    // Predicated region
    $region22: #{actor_forward.1} parent=1 // pred_check
      _
    $region23: #{actor_forward.1} parent=1 // pred_check_branch
      %29 = sbr.rel (0) target = $region25
    $region24: #{actor_forward.1} parent=1 // pred_region
      %s31 = ssub.s32 1024, 1024
      %32 = vsyncadd [#allocation3], %s31
      %s33 = sshll.u32 [#allocation2], 4
      %s34 = int_to_ptr.vmem [resolvable:$true] %s33
      %39 = dma.hbm_to_vmem [thread:$0]  %s5, 1024, %s34, [#allocation3], 64, 64, 4
    $region25: #{actor_forward.1} parent=1 // pred_fallthru
      _
    // Predicated region
    $region26: #{actor_forward.1} parent=1 // pred_check
      _
    $region27: #{actor_forward.1} parent=1 // pred_check_branch
      %41 = sbr.rel (0) target = $region29
    $region28: #{actor_forward.1} parent=1 // pred_region
      _
    $region29: #{actor_forward.1} parent=1 // pred_fallthru
      _
    // Predicated region
    $region30: #{actor_forward.1} parent=1 // pred_check
      _
    $region31: #{actor_forward.1} parent=1 // pred_check_branch
      %43 = sbr.rel (0) target = $region33
    $region32: #{actor_forward.1} parent=1 // pred_region
      _
    $region33: #{actor_forward.1} parent=1 // pred_fallthru
      _
    // Predicated region
    $region34: #{actor_forward.1} parent=1 // pred_check
      _
    $region35: #{actor_forward.1} parent=1 // pred_check_branch
      %45 = sbr.rel (0) target = $region37
    $region36: #{actor_forward.1} parent=1 // pred_region
      _
    $region37: #{actor_forward.1} parent=1 // pred_fallthru
      _
    // Predicated region
    $region38: #{actor_forward.1} parent=1 // pred_check
      _
    $region39: #{actor_forward.1} parent=1 // pred_check_branch
      %47 = sbr.rel (0) target = $region41
    $region40: #{actor_forward.1} parent=1 // pred_region
      %s49 = ssub.s32 1024, 1024
      %50 = vsyncadd [#allocation5], %s49
      %s51 = sshll.u32 [#allocation4], 4
      %s52 = int_to_ptr.vmem [resolvable:$true] %s51
      %57 = dma.hbm_to_vmem [thread:$0]  %s9, 1024, %s52, [#allocation5], 64, 64, 4
    $region41: #{actor_forward.1} parent=1 // pred_fallthru
      _
    // Predicated region
    $region42: #{actor_forward.1} parent=1 // pred_check
      _
    $region43: #{actor_forward.1} parent=1 // pred_check_branch
      %59 = sbr.rel (0) target = $region45
    $region44: #{actor_forward.1} parent=1 // pred_region
      _
    $region45: #{actor_forward.1} parent=1 // pred_fallthru
      _
    // Predicated region
    $region46: #{actor_forward.1} parent=1 // pred_check
      _
    $region47: #{actor_forward.1} parent=1 // pred_check_branch
      %61 = sbr.rel (0) target = $region49
    $region48: #{actor_forward.1} parent=1 // pred_region
      %62 = dma.done [#allocation3], 1024
    $region49: #{actor_forward.1} parent=1 // pred_fallthru
      _
    // Predicated region
    $region50: #{actor_forward.1} parent=1 // pred_check
      _
    $region51: #{actor_forward.1} parent=1 // pred_check_branch
      %64 = sbr.rel (0) target = $region53
    $region52: #{actor_forward.1} parent=1 // pred_region
      %65 = dma.done [#allocation5], 1024
    $region53: #{actor_forward.1} parent=1 // pred_fallthru
      _
    %v67 = vld [vmem:[%s0] sm:$0xf]
    %v68 = vld [vmem:[%s1] sm:$0xf]
    %v69 = vld [vmem:[%s1 + $0x4] sm:$0xf]
    %v70 = vld [vmem:[%s2] sm:$0x1]
    %v72 = vlaneseq
    %v73 = vshrl.u32 %v72, 7
    %v74 = vsub.s32 0, %v73
    %v75 = vrot.slane %v70, %v74
    %v79 = vunpack.c.l.b16 %v68
    %v80 = vunpack.c.l.b16 %v69
    %v81 = vpack.c.b16 %v80, %v79
    %vm83 = vcmask 130048
    %v85 = vsel %vm83, %v67, 0
    %87 = vmatprep.subr.bf16.mxu0 0
    %88 = vmatpush1.bf16.msra.mxu0 %v81
    %89 = vmatprep.subr.bf16.mxu0 0
    %90 = vmatpush1.bf16.msra.mxu0 0
    %91 = vmatprep.subr.bf16.mxu0 0
    %92 = vmatpush1.bf16.msra.mxu0 0
    %93 = vmatprep.subr.bf16.mxu0 0
    %94 = vmatpush1.bf16.msra.mxu0 0
    %95 = vmatprep.subr.bf16.mxu0 0
    %96 = vmatpush1.bf16.msra.mxu0 0
    %97 = vmatprep.subr.bf16.mxu0 0
    %98 = vmatpush1.bf16.msra.mxu0 0
    %99 = vmatprep.subr.bf16.mxu0 0
    %100 = vmatpush1.bf16.msra.mxu0 0
    %101 = vmatprep.subr.bf16.mxu0 0
    %102 = vmatpush1.bf16.msra.mxu0 0
    %103 = vmatprep.subr.bf16.mxu0 0
    %104 = vmatpush1.bf16.msra.mxu0 0
    %105 = vmatprep.subr.bf16.mxu0 0
    %106 = vmatpush1.bf16.msra.mxu0 0
    %107 = vmatprep.subr.bf16.mxu0 0
    %108 = vmatpush1.bf16.msra.mxu0 0
    %109 = vmatprep.subr.bf16.mxu0 0
    %110 = vmatpush1.bf16.msra.mxu0 0
    %111 = vmatprep.subr.bf16.mxu0 0
    %112 = vmatpush1.bf16.msra.mxu0 0
    %113 = vmatprep.subr.bf16.mxu0 0
    %114 = vmatpush1.bf16.msra.mxu0 0
    %115 = vmatprep.subr.bf16.mxu0 0
    %116 = vmatpush1.bf16.msra.mxu0 0
    %117 = vmatprep.subr.bf16.mxu0 0
    %118 = vmatpush1.bf16.msra.mxu0 0
    %119 = vmatprep.mubr.bf16.mxu0 0
    %120 = vmatmul.mubr.bf16.gmra.mrb[0].mxu0 %v85
    %v121 = vpop.f32.mrb[0].mxu0
    %v122 = vadd.f32 %v75, %v121
    %v123 = vpop.f32.mrb[0].mxu0
    %v124 = vpop.f32.mrb[0].mxu0
    %v125 = vpop.f32.mrb[0].mxu0
    %126 = vdwg.mxu0
    %v127 = vld [vmem:[%s3] sm:$0x1]
    %v128 = vld [vmem:[%s4] sm:$0x1]
    %129 = vadd.xlane.f32.xlu0 %v122
    %v130 = vpop.xlane.xlu0 %129
    %v131 = vmul.f32 %v122, %v122
    %132 = vadd.xlane.f32.xlu0 %v131
    %v133 = vpop.xlane.xlu0 %132
    %v134 = vmul.f32 %v130, 0.015625
    %v135 = vmul.f32 %v133, 0.015625
    %v136 = vmul.f32 %v134, %v134
    %v137 = vsub.f32 %v135, %v136
    %v138 = vadd.f32 %v137, 1e-05
    %v139 = vrsqrt.pop %v138
    %v140 = vsub.f32 %v122, %v134
    %v141 = vmul.f32 %v140, %v139
    %v143 = vlaneseq
    %v144 = vshrl.u32 %v143, 7
    %v145 = vsub.s32 0, %v144
    %v146 = vrot.slane %v127, %v145
    %v148 = vmul.f32 %v141, %v146
    %v150 = vlaneseq
    %v151 = vshrl.u32 %v150, 7
    %v152 = vsub.s32 0, %v151
    %v153 = vrot.slane %v128, %v152
    %v155 = vadd.f32 %v148, %v153
    %v156 = vmax.f32 %v155, 0.0
    %v157 = vpack.c.bf16 %v156, %v156
    %v158 = vld [vmem:[#allocation2] sm:$0xf]
    %v159 = vld [vmem:[#allocation2 + $0x4] sm:$0xf]
    %v160 = vld [vmem:[#allocation2 + $0x8] sm:$0xf]
    %v161 = vld [vmem:[#allocation2 + $0xc] sm:$0xf]
    %v162 = vld [vmem:[#allocation2 + $0x10] sm:$0xf]
    %v163 = vld [vmem:[#allocation2 + $0x14] sm:$0xf]
    %v164 = vld [vmem:[#allocation2 + $0x18] sm:$0xf]
    %v165 = vld [vmem:[#allocation2 + $0x1c] sm:$0xf]
    %v166 = vld [vmem:[#allocation2 + $0x20] sm:$0xf]
    %v167 = vld [vmem:[#allocation2 + $0x24] sm:$0xf]
    %v168 = vld [vmem:[#allocation2 + $0x28] sm:$0xf]
    %v169 = vld [vmem:[#allocation2 + $0x2c] sm:$0xf]
    %v170 = vld [vmem:[#allocation2 + $0x30] sm:$0xf]
    %v171 = vld [vmem:[#allocation2 + $0x34] sm:$0xf]
    %v172 = vld [vmem:[#allocation2 + $0x38] sm:$0xf]
    %v173 = vld [vmem:[#allocation2 + $0x3c] sm:$0xf]
    %v174 = vld [vmem:[%s6] sm:$0x1]
    %v176 = vlaneseq
    %v177 = vshrl.u32 %v176, 7
    %v178 = vsub.s32 0, %v177
    %v179 = vrot.slane %v174, %v178
    %v197 = vunpack.c.l.b16 %v158
    %v198 = vunpack.c.l.b16 %v159
    %v199 = vunpack.c.l.b16 %v160
    %v200 = vunpack.c.l.b16 %v161
    %v201 = vunpack.c.l.b16 %v162
    %v202 = vunpack.c.l.b16 %v163
    %v203 = vunpack.c.l.b16 %v164
    %v204 = vunpack.c.l.b16 %v165
    %v205 = vunpack.c.l.b16 %v166
    %v206 = vunpack.c.l.b16 %v167
    %v207 = vunpack.c.l.b16 %v168
    %v208 = vunpack.c.l.b16 %v169
    %v209 = vunpack.c.l.b16 %v170
    %v210 = vunpack.c.l.b16 %v171
    %v211 = vunpack.c.l.b16 %v172
    %v212 = vunpack.c.l.b16 %v173
    %v213 = vpack.c.b16 %v198, %v197
    %v214 = vpack.c.b16 %v200, %v199
    %v215 = vpack.c.b16 %v202, %v201
    %v216 = vpack.c.b16 %v204, %v203
    %v217 = vpack.c.b16 %v206, %v205
    %v218 = vpack.c.b16 %v208, %v207
    %v219 = vpack.c.b16 %v210, %v209
    %v220 = vpack.c.b16 %v212, %v211
    %229 = vmatprep.subr.bf16.mxu0 0
    %230 = vmatpush1.bf16.msra.mxu0 %v213
    %231 = vmatprep.subr.bf16.mxu0 0
    %232 = vmatpush1.bf16.msra.mxu0 %v214
    %233 = vmatprep.subr.bf16.mxu0 0
    %234 = vmatpush1.bf16.msra.mxu0 %v215
    %235 = vmatprep.subr.bf16.mxu0 0
    %236 = vmatpush1.bf16.msra.mxu0 %v216
    %237 = vmatprep.subr.bf16.mxu0 0
    %238 = vmatpush1.bf16.msra.mxu0 %v217
    %239 = vmatprep.subr.bf16.mxu0 0
    %240 = vmatpush1.bf16.msra.mxu0 %v218
    %241 = vmatprep.subr.bf16.mxu0 0
    %242 = vmatpush1.bf16.msra.mxu0 %v219
    %243 = vmatprep.subr.bf16.mxu0 0
    %244 = vmatpush1.bf16.msra.mxu0 %v220
    %245 = vmatprep.subr.bf16.mxu0 0
    %246 = vmatpush1.bf16.msra.mxu0 0
    %247 = vmatprep.subr.bf16.mxu0 0
    %248 = vmatpush1.bf16.msra.mxu0 0
    %249 = vmatprep.subr.bf16.mxu0 0
    %250 = vmatpush1.bf16.msra.mxu0 0
    %251 = vmatprep.subr.bf16.mxu0 0
    %252 = vmatpush1.bf16.msra.mxu0 0
    %253 = vmatprep.subr.bf16.mxu0 0
    %254 = vmatpush1.bf16.msra.mxu0 0
    %255 = vmatprep.subr.bf16.mxu0 0
    %256 = vmatpush1.bf16.msra.mxu0 0
    %257 = vmatprep.subr.bf16.mxu0 0
    %258 = vmatpush1.bf16.msra.mxu0 0
    %259 = vmatprep.subr.bf16.mxu0 0
    %260 = vmatpush1.bf16.msra.mxu0 0
    %261 = vmatprep.mubr.bf16.mxu0 0
    %262 = vmatmul.mubr.bf16.gmra.mrb[0].mxu0 %v157
    %v263 = vpop.f32.mrb[0].mxu0
    %v264 = vadd.f32 %v179, %v263
    %v265 = vpop.f32.mrb[0].mxu0
    %v266 = vpop.f32.mrb[0].mxu0
    %v267 = vpop.f32.mrb[0].mxu0
    %268 = vdwg.mxu0
    %v269 = vld [vmem:[%s7] sm:$0x1]
    %v270 = vld [vmem:[%s8] sm:$0x1]
    %271 = vadd.xlane.f32.xlu0 %v264
    %v272 = vpop.xlane.xlu0 %271
    %v273 = vmul.f32 %v264, %v264
    %274 = vadd.xlane.f32.xlu0 %v273
    %v275 = vpop.xlane.xlu0 %274
    %v276 = vmul.f32 %v272, 0.015625
    %v277 = vmul.f32 %v275, 0.015625
    %v278 = vmul.f32 %v276, %v276
    %v279 = vsub.f32 %v277, %v278
    %v280 = vadd.f32 %v279, 1e-05
    %v281 = vrsqrt.pop %v280
    %v282 = vsub.f32 %v264, %v276
    %v283 = vmul.f32 %v282, %v281
    %v285 = vlaneseq
    %v286 = vshrl.u32 %v285, 7
    %v287 = vsub.s32 0, %v286
    %v288 = vrot.slane %v269, %v287
    %v290 = vmul.f32 %v283, %v288
    %v292 = vlaneseq
    %v293 = vshrl.u32 %v292, 7
    %v294 = vsub.s32 0, %v293
    %v295 = vrot.slane %v270, %v294
    %v297 = vadd.f32 %v290, %v295
    %v298 = vmax.f32 %v297, 0.0
    %v299 = vpack.c.bf16 %v298, %v298
    %v300 = vld [vmem:[#allocation4] sm:$0xf]
    %v301 = vld [vmem:[#allocation4 + $0x4] sm:$0xf]
    %v302 = vld [vmem:[#allocation4 + $0x8] sm:$0xf]
    %v303 = vld [vmem:[#allocation4 + $0xc] sm:$0xf]
    %v304 = vld [vmem:[#allocation4 + $0x10] sm:$0xf]
    %v305 = vld [vmem:[#allocation4 + $0x14] sm:$0xf]
    %v306 = vld [vmem:[#allocation4 + $0x18] sm:$0xf]
    %v307 = vld [vmem:[#allocation4 + $0x1c] sm:$0xf]
    %v308 = vld [vmem:[#allocation4 + $0x20] sm:$0xf]
    %v309 = vld [vmem:[#allocation4 + $0x24] sm:$0xf]
    %v310 = vld [vmem:[#allocation4 + $0x28] sm:$0xf]
    %v311 = vld [vmem:[#allocation4 + $0x2c] sm:$0xf]
    %v312 = vld [vmem:[#allocation4 + $0x30] sm:$0xf]
    %v313 = vld [vmem:[#allocation4 + $0x34] sm:$0xf]
    %v314 = vld [vmem:[#allocation4 + $0x38] sm:$0xf]
    %v315 = vld [vmem:[#allocation4 + $0x3c] sm:$0xf]
    %v316 = vld [vmem:[%s10] sm:$0x1]
    %v318 = vlaneseq
    %v319 = vshrl.u32 %v318, 7
    %v320 = vsub.s32 0, %v319
    %v321 = vrot.slane %v316, %v320
    %v339 = vunpack.c.l.b16 %v300
    %v340 = vunpack.c.l.b16 %v301
    %v341 = vunpack.c.l.b16 %v302
    %v342 = vunpack.c.l.b16 %v303
    %v343 = vunpack.c.l.b16 %v304
    %v344 = vunpack.c.l.b16 %v305
    %v345 = vunpack.c.l.b16 %v306
    %v346 = vunpack.c.l.b16 %v307
    %v347 = vunpack.c.l.b16 %v308
    %v348 = vunpack.c.l.b16 %v309
    %v349 = vunpack.c.l.b16 %v310
    %v350 = vunpack.c.l.b16 %v311
    %v351 = vunpack.c.l.b16 %v312
    %v352 = vunpack.c.l.b16 %v313
    %v353 = vunpack.c.l.b16 %v314
    %v354 = vunpack.c.l.b16 %v315
    %v355 = vpack.c.b16 %v340, %v339
    %v356 = vpack.c.b16 %v342, %v341
    %v357 = vpack.c.b16 %v344, %v343
    %v358 = vpack.c.b16 %v346, %v345
    %v359 = vpack.c.b16 %v348, %v347
    %v360 = vpack.c.b16 %v350, %v349
    %v361 = vpack.c.b16 %v352, %v351
    %v362 = vpack.c.b16 %v354, %v353
    %371 = vmatprep.subr.bf16.mxu0 0
    %372 = vmatpush1.bf16.msra.mxu0 %v355
    %373 = vmatprep.subr.bf16.mxu0 0
    %374 = vmatpush1.bf16.msra.mxu0 %v356
    %375 = vmatprep.subr.bf16.mxu0 0
    %376 = vmatpush1.bf16.msra.mxu0 %v357
    %377 = vmatprep.subr.bf16.mxu0 0
    %378 = vmatpush1.bf16.msra.mxu0 %v358
    %379 = vmatprep.subr.bf16.mxu0 0
    %380 = vmatpush1.bf16.msra.mxu0 %v359
    %381 = vmatprep.subr.bf16.mxu0 0
    %382 = vmatpush1.bf16.msra.mxu0 %v360
    %383 = vmatprep.subr.bf16.mxu0 0
    %384 = vmatpush1.bf16.msra.mxu0 %v361
    %385 = vmatprep.subr.bf16.mxu0 0
    %386 = vmatpush1.bf16.msra.mxu0 %v362
    %387 = vmatprep.subr.bf16.mxu0 0
    %388 = vmatpush1.bf16.msra.mxu0 0
    %389 = vmatprep.subr.bf16.mxu0 0
    %390 = vmatpush1.bf16.msra.mxu0 0
    %391 = vmatprep.subr.bf16.mxu0 0
    %392 = vmatpush1.bf16.msra.mxu0 0
    %393 = vmatprep.subr.bf16.mxu0 0
    %394 = vmatpush1.bf16.msra.mxu0 0
    %395 = vmatprep.subr.bf16.mxu0 0
    %396 = vmatpush1.bf16.msra.mxu0 0
    %397 = vmatprep.subr.bf16.mxu0 0
    %398 = vmatpush1.bf16.msra.mxu0 0
    %399 = vmatprep.subr.bf16.mxu0 0
    %400 = vmatpush1.bf16.msra.mxu0 0
    %401 = vmatprep.subr.bf16.mxu0 0
    %402 = vmatpush1.bf16.msra.mxu0 0
    %403 = vmatprep.mubr.bf16.mxu0 0
    %404 = vmatmul.mubr.bf16.gmra.mrb[0].mxu0 %v299
    %v405 = vpop.f32.mrb[0].mxu0
    %v406 = vadd.f32 %v321, %v405
    %v407 = vpop.f32.mrb[0].mxu0
    %v408 = vpop.f32.mrb[0].mxu0
    %v409 = vpop.f32.mrb[0].mxu0
    %410 = vdwg.mxu0
    %v411 = vtanh.pop %v406
    %v412 = vpack.c.bf16 %v411, %v411
    %413 = vst [vmem:[%s11] sm:$0xf] %v412
    // Predicated region
    $region54: #{actor_forward.1} parent=1 // pred_check
      _
    $region55: #{actor_forward.1} parent=1 // pred_check_branch
      %415 = sbr.rel (0) target = $region57
    $region56: #{actor_forward.1} parent=1 // pred_region
      _
    $region57: #{actor_forward.1} parent=1 // pred_fallthru
      _
    // Predicated region
    $region58: #{actor_forward.1} parent=1 // pred_check
      _
    $region59: #{actor_forward.1} parent=1 // pred_check_branch
      %417 = sbr.rel (0) target = $region61
    $region60: #{actor_forward.1} parent=1 // pred_region
      _
    $region61: #{actor_forward.1} parent=1 // pred_fallthru
      _
    %418 = vsyncpa [#allocation3], 1
    %419 = vsyncpa [#allocation5], 1

</llo_original>
